<compile_context>
chip_gen: v5e
topology: v5e:2x2
jax: 0.10.0
libtpu: 0.0.40
codegen_flags: <defaults>
</compile_context>

<pallas_src>
import numpy as np
import jax
import jax.numpy as jnp
from jax.experimental import pallas as pl
from jax.experimental.pallas import tpu as pltpu

# ----------------------------- configuration -------------------------------
ENSEMBLE_SIZE = 4                        # images aggregated per ensemble group
NUM_GROUPS = 64                          # ensemble groups in the flattened batch
N = ENSEMBLE_SIZE * NUM_GROUPS           # total images
C, H, W = 1, 16, 16                      # resolution = 16 (square images)
D = C * H * W                            # flattened image size (2 * 128 lanes)
NSCREENS = 8                             # predictions per sample
F = NSCREENS + 1                         # model output: predictions + 1 weight
F_PAD = 128                              # lane-padded model output width
SNR = 10.0
PIXEL_AVERAGE = 1.0
NOISE_STD = (1.0 / SNR) * PIXEL_AVERAGE  # == self.noise in the torch module
UNIFORM_ENSEMBLE = False

# Batch tile: whole ensemble groups per tile, multiple of 8 sublanes.  At the
# current N=256 use 128 so the grid length (2) matches v7x's 2 TensorCores; at
# realistic batch sizes raise TN to >=512 (tiling measurements: ~85% of HBM
# roofline at tile 512 vs ~30-60% at 64-256).
TN = 128
G_TILE = TN // ENSEMBLE_SIZE
assert N % TN == 0 and TN % ENSEMBLE_SIZE == 0 and TN % 8 == 0
assert NUM_GROUPS % G_TILE == 0


def _make_mask(resolution: int) -> np.ndarray:
    """Replicates EnsembleModel.__init__ mask construction exactly."""
    mask = np.ones((resolution, resolution), dtype=np.float32)
    center = (resolution // 2, resolution // 2)
    radius = min(center)
    Y, X = np.ogrid[:resolution, :resolution]
    outside = (X - center[0]) ** 2 + (Y - center[1]) ** 2 > radius ** 2
    spider_radius = int(0.22 * resolution)
    spider = (X - center[0]) ** 2 + (Y - center[1]) ** 2 < spider_radius ** 2
    bkg_value = 0.0
    mask[outside] = bkg_value
    mask[spider] = bkg_value
    return mask


# ------------------------------- kernel ------------------------------------
def ensemble_kernel(img_ref, noise_ref, maskstd_ref, w_ref, b_ref,
                    gmat_ref, sel_ref, noisy_ref, ens_ref):
    # 1) masked Gaussian noise.  maskstd already carries NOISE_STD, so this is
    #    one mul + one add on the VPU (all f32: v5e has no bf16 VPU ALUs).
    noisy = img_ref[...] + noise_ref[...] * maskstd_ref[...]
    noisy_ref[...] = noisy

    # 2) synthetic inner model: single linear layer; bf16 on MXU, f32 accumulation.
    out = jnp.dot(noisy.astype(jnp.bfloat16), w_ref[...],
                  preferred_element_type=jnp.float32) + b_ref[...]     # (TN, F_PAD)

    # 3) ensemble aggregation, fused into a single small MXU contraction.
    #    fused = [preds * w | w | 0 ...]  (column NSCREENS carries the raw weight)
    #    sel is a precomputed (1, F_PAD) selector: 1.0 at the weight column.
    sel = sel_ref[...]
    if UNIFORM_ENSEMBLE:
        fused = out * (1.0 - sel) + sel
    else:
        w_col = out[:, NSCREENS:NSCREENS + 1]                          # (TN, 1)
        fused = out * (w_col * (1.0 - sel) + sel)

    # 0/1 group-sum matrix is a resident VMEM constant (hoisted out of the body).
    gsum = jnp.dot(gmat_ref[...], fused,
                   preferred_element_type=jnp.float32)                 # (G_TILE, F_PAD)

    ssum = gsum[:, NSCREENS:NSCREENS + 1]                              # sum of weights
    ens_ref[...] = gsum / ssum                                         # exact divide


# ------------------------------- wrapper ------------------------------------
@jax.jit
def ensemble_forward(images_nchw, tags, noise_flat, maskstd_flat,
                     w_pad_bf16, b_pad, gmat, sel):
    """Returns (ensemble_output, tags[::E], noisy_images) like the torch forward."""
    img_flat = images_nchw.reshape(N, D)

    noisy_flat, ens_pad = pl.pallas_call(
        ensemble_kernel,
        out_shape=(
            jax.ShapeDtypeStruct((N, D), jnp.float32),                 # noisy images
            jax.ShapeDtypeStruct((NUM_GROUPS, F_PAD), jnp.float32),    # ensemble out
        ),
        grid=(N // TN,),
        in_specs=[
            pl.BlockSpec((TN, D), lambda i: (i, 0)),          # image tile (pipelined)
            pl.BlockSpec((TN, D), lambda i: (i, 0)),          # noise tile (pipelined)
            pl.BlockSpec((1, D), lambda i: (0, 0)),           # mask * NOISE_STD (resident)
            pl.BlockSpec((D, F_PAD), lambda i: (0, 0)),       # model weight, bf16 (resident)
            pl.BlockSpec((1, F_PAD), lambda i: (0, 0)),       # model bias (resident)
            pl.BlockSpec((G_TILE, TN), lambda i: (0, 0)),     # 0/1 group-sum matrix (resident)
            pl.BlockSpec((1, F_PAD), lambda i: (0, 0)),       # weight-column selector (resident)
        ],
        out_specs=(
            pl.BlockSpec((TN, D), lambda i: (i, 0)),          # noisy images tile
            pl.BlockSpec((G_TILE, F_PAD), lambda i: (i, 0)),  # lane-dense ensemble tile
        ),
        compiler_params=pltpu.CompilerParams(
            dimension_semantics=("parallel",)),               # v7x: shard batch over 2 TCs
    )(img_flat, noise_flat, maskstd_flat, w_pad_bf16, b_pad, gmat, sel)

    ensemble_output = ens_pad[:, :NSCREENS]
    noisy_images = noisy_flat.reshape(N, C, H, W)
    tags_out = tags[::ENSEMBLE_SIZE]
    return ensemble_output, tags_out, noisy_images


# --------------------------------- main -------------------------------------
if __name__ == "__main__":
    key = jax.random.PRNGKey(0)
    k_img, k_tag, k_w, k_b, k_noise = jax.random.split(key, 5)

    images = jax.random.uniform(k_img, (N, C, H, W), dtype=jnp.float32)
    tags = jax.random.uniform(k_tag, (N, NSCREENS), dtype=jnp.float32)
    noise = jax.random.normal(k_noise, (N, D), dtype=jnp.float32)

    # Deterministic synthetic "model" parameters (small scale; bias pushes the
    # ensemble weight column toward 1.0 so sum_weights stays away from zero).
    # TODO(synk): the torch forward accepts an arbitrary inner `model`; here it is
    # a synthetic single linear layer, since the wrapper itself is model-agnostic.
    w = 0.01 * jax.random.normal(k_w, (D, F), dtype=jnp.float32)
    b = jnp.concatenate(
        [0.01 * jax.random.normal(k_b, (1, F - 1), dtype=jnp.float32),
         jnp.ones((1, 1), dtype=jnp.float32)], axis=1)

    # Zero-pad the model-output dim to a lane-dense 128 columns; weights in bf16.
    w_pad = jnp.zeros((D, F_PAD), jnp.float32).at[:, :F].set(w).astype(jnp.bfloat16)
    b_pad = jnp.zeros((1, F_PAD), jnp.float32).at[:, :F].set(b)

    mask_hw = jnp.asarray(_make_mask(H))
    maskstd_flat = (jnp.broadcast_to(mask_hw[None, :, :], (C, H, W))
                    * NOISE_STD).reshape(1, D)

    # Loop-invariant constants, hoisted out of the kernel body.
    gmat_np = (np.arange(TN)[None, :] // ENSEMBLE_SIZE
               == np.arange(G_TILE)[:, None]).astype(np.float32)
    gmat = jnp.asarray(gmat_np)                                        # (G_TILE, TN)
    sel = jnp.zeros((1, F_PAD), jnp.float32).at[0, NSCREENS].set(1.0)  # weight column

    ens_out, tags_out, noisy_images = ensemble_forward(
        images, tags, noise, maskstd_flat, w_pad, b_pad, gmat, sel)
    jax.block_until_ready((ens_out, tags_out, noisy_images))

    # ---------------------------- correctness checks -------------------------
    images_np = np.asarray(images)
    noisy_np = np.asarray(noisy_images)
    noise_np = np.asarray(noise).reshape(N, C, H, W)
    maskstd_np = np.asarray(maskstd_flat).reshape(C, H, W)

    # (a) outside the circular/spider mask no noise is added (exact match).
    zero_px = maskstd_np == 0.0
    np.testing.assert_array_equal(noisy_np[:, zero_px], images_np[:, zero_px])

    # (a') full noisy-image reproduction: images + noise * (std * mask).
    np.testing.assert_allclose(noisy_np, images_np + noise_np * maskstd_np[None],
                               rtol=1e-6, atol=1e-6)

    # (b) inside the mask the injected noise is ~N(0, NOISE_STD * mask).
    nz = maskstd_np != 0.0
    z = (noisy_np[:, nz] - images_np[:, nz]) / maskstd_np[nz]
    assert abs(float(z.mean())) < 0.05, float(z.mean())
    assert 0.9 < float(z.std()) < 1.1, float(z.std())

    # (c) ensemble math reference, computed from the kernel's own noisy images.
    ref_out = jnp.dot(noisy_images.reshape(N, D).astype(jnp.bfloat16),
                      w.astype(jnp.bfloat16),
                      preferred_element_type=jnp.float32) + b
    ref_preds, ref_wts = ref_out[:, :-1], ref_out[:, -1]
    if UNIFORM_ENSEMBLE:
        ref_wts = jnp.ones_like(ref_wts)
    ref_wp = (ref_preds * ref_wts[:, None]).reshape(
        NUM_GROUPS, ENSEMBLE_SIZE, -1).sum(axis=1)
    ref_sw = ref_wts.reshape(NUM_GROUPS, ENSEMBLE_SIZE).sum(axis=1)
    ref_ens = ref_wp / ref_sw[:, None]
    np.testing.assert_allclose(np.asarray(ens_out), np.asarray(ref_ens),
                               rtol=1e-2, atol=1e-4)

    assert ens_out.shape == (NUM_GROUPS, NSCREENS)
    assert tags_out.shape == (NUM_GROUPS, NSCREENS)
    assert noisy_images.shape == (N, C, H, W)

    print("KERNEL_OK")
</pallas_src>

<mosaic_0001>
module attributes {stable_mosaic.version = 11 : i64} {
  func.func @ensemble_kernel(%arg0: i32, %arg1: memref<128x256xf32, #tpu.memory_space<vmem>>, %arg2: memref<128x256xf32, #tpu.memory_space<vmem>>, %arg3: memref<1x256xf32, #tpu.memory_space<vmem>>, %arg4: memref<256x128xbf16, #tpu.memory_space<vmem>>, %arg5: memref<1x128xf32, #tpu.memory_space<vmem>>, %arg6: memref<32x128xf32, #tpu.memory_space<vmem>>, %arg7: memref<1x128xf32, #tpu.memory_space<vmem>>, %arg8: memref<128x256xf32, #tpu.memory_space<vmem>>, %arg9: memref<32x128xf32, #tpu.memory_space<vmem>>) attributes {dimension_semantics = [#tpu.dimension_semantics<parallel>], iteration_bounds = array<i64: 2>, scalar_prefetch = 0 : i64, scratch_operands = 0 : i64, tpu.core_type = #tpu.core_type<tc>, window_params = [{transform_indices = @transform_0, window_bounds = array<i64: 128, 256>}, {transform_indices = @transform_1, window_bounds = array<i64: 128, 256>}, {pipeline_mode = #tpu.pipeline_mode<synchronous>, transform_indices = @transform_2, window_bounds = array<i64: 1, 256>}, {pipeline_mode = #tpu.pipeline_mode<synchronous>, transform_indices = @transform_3, window_bounds = array<i64: 256, 128>}, {pipeline_mode = #tpu.pipeline_mode<synchronous>, transform_indices = @transform_4, window_bounds = array<i64: 1, 128>}, {pipeline_mode = #tpu.pipeline_mode<synchronous>, transform_indices = @transform_5, window_bounds = array<i64: 32, 128>}, {pipeline_mode = #tpu.pipeline_mode<synchronous>, transform_indices = @transform_6, window_bounds = array<i64: 1, 128>}, {transform_indices = @transform_7, window_bounds = array<i64: 128, 256>}, {transform_indices = @transform_8, window_bounds = array<i64: 32, 128>}]} {
    %c0 = arith.constant 0 : index
    %c0_0 = arith.constant 0 : index
    %0 = vector.load %arg1[%c0, %c0_0] : memref<128x256xf32, #tpu.memory_space<vmem>>, vector<128x256xf32>
    %c0_1 = arith.constant 0 : index
    %c0_2 = arith.constant 0 : index
    %1 = vector.load %arg2[%c0_1, %c0_2] : memref<128x256xf32, #tpu.memory_space<vmem>>, vector<128x256xf32>
    %c0_3 = arith.constant 0 : index
    %c0_4 = arith.constant 0 : index
    %2 = vector.load %arg3[%c0_3, %c0_4] : memref<1x256xf32, #tpu.memory_space<vmem>>, vector<1x256xf32>
    %3 = vector.broadcast %2 : vector<1x256xf32> to vector<128x256xf32>
    %4 = arith.mulf %1, %3 : vector<128x256xf32>
    %5 = arith.addf %0, %4 : vector<128x256xf32>
    %c0_5 = arith.constant 0 : index
    %c0_6 = arith.constant 0 : index
    %6 = vector.load %arg8[%c0_5, %c0_6] : memref<128x256xf32, #tpu.memory_space<vmem>>, vector<128x256xf32>
    tpu.vector_store %arg8[%c0_5, %c0_6], %5 {strides = array<i32>} : memref<128x256xf32, #tpu.memory_space<vmem>>, vector<128x256xf32>,
    %7 = arith.truncf %5 : vector<128x256xf32> to vector<128x256xbf16>
    %c0_7 = arith.constant 0 : index
    %c0_8 = arith.constant 0 : index
    %8 = vector.load %arg4[%c0_7, %c0_8] : memref<256x128xbf16, #tpu.memory_space<vmem>>, vector<256x128xbf16>
    %cst = arith.constant dense<0.000000e+00> : vector<128x128xf32>
    %9 = tpu.matmul %7, %8, %cst {dimension_numbers = #tpu.dot_dimension_numbers<[1], [0], [0], [1], [0, 0, 1, 1], [], []>} : vector<128x256xbf16>, vector<256x128xbf16>, vector<128x128xf32> -> vector<128x128xf32>
    %c0_9 = arith.constant 0 : index
    %c0_10 = arith.constant 0 : index
    %10 = vector.load %arg5[%c0_9, %c0_10] : memref<1x128xf32, #tpu.memory_space<vmem>>, vector<1x128xf32>
    %11 = vector.broadcast %10 : vector<1x128xf32> to vector<128x128xf32>
    %12 = arith.addf %9, %11 : vector<128x128xf32>
    %c0_11 = arith.constant 0 : index
    %c0_12 = arith.constant 0 : index
    %13 = vector.load %arg7[%c0_11, %c0_12] : memref<1x128xf32, #tpu.memory_space<vmem>>, vector<1x128xf32>
    %14 = vector.extract_strided_slice %12 {offsets = [0, 8], sizes = [128, 1], strides = [1, 1]} : vector<128x128xf32> to vector<128x1xf32>
    %cst_13 = arith.constant 1.000000e+00 : f32
    %15 = vector.broadcast %cst_13 : f32 to vector<1x128xf32>
    %16 = arith.subf %15, %13 : vector<1x128xf32>
    %17 = vector.broadcast %14 : vector<128x1xf32> to vector<128x128xf32>
    %18 = vector.broadcast %16 : vector<1x128xf32> to vector<128x128xf32>
    %19 = arith.mulf %17, %18 : vector<128x128xf32>
    %20 = vector.broadcast %13 : vector<1x128xf32> to vector<128x128xf32>
    %21 = arith.addf %19, %20 : vector<128x128xf32>
    %22 = arith.mulf %12, %21 : vector<128x128xf32>
    %c0_14 = arith.constant 0 : index
    %c0_15 = arith.constant 0 : index
    %23 = vector.load %arg6[%c0_14, %c0_15] : memref<32x128xf32, #tpu.memory_space<vmem>>, vector<32x128xf32>
    %cst_16 = arith.constant dense<0.000000e+00> : vector<32x128xf32>
    %24 = tpu.matmul %23, %22, %cst_16 {dimension_numbers = #tpu.dot_dimension_numbers<[1], [0], [0], [1], [0, 0, 1, 1], [], []>} : vector<32x128xf32>, vector<128x128xf32>, vector<32x128xf32> -> vector<32x128xf32>
    %25 = vector.extract_strided_slice %24 {offsets = [0, 8], sizes = [32, 1], strides = [1, 1]} : vector<32x128xf32> to vector<32x1xf32>
    %26 = vector.broadcast %25 : vector<32x1xf32> to vector<32x128xf32>
    %27 = arith.divf %24, %26 : vector<32x128xf32>
    %c0_17 = arith.constant 0 : index
    %c0_18 = arith.constant 0 : index
    %28 = vector.load %arg9[%c0_17, %c0_18] : memref<32x128xf32, #tpu.memory_space<vmem>>, vector<32x128xf32>
    tpu.vector_store %arg9[%c0_17, %c0_18], %27 {strides = array<i32>} : memref<32x128xf32, #tpu.memory_space<vmem>>, vector<32x128xf32>,
    return
  }
  func.func @transform_0(%arg0: i32) -> (i32, i32) {
    %c0_i32 = arith.constant 0 : i32
    %c0_i32_0 = arith.constant 0 : i32
    return %arg0, %c0_i32 : i32, i32
  }
  func.func @transform_1(%arg0: i32) -> (i32, i32) {
    %c0_i32 = arith.constant 0 : i32
    %c0_i32_0 = arith.constant 0 : i32
    return %arg0, %c0_i32 : i32, i32
  }
  func.func @transform_2(%arg0: i32) -> (i32, i32) {
    %c0_i32 = arith.constant 0 : i32
    %c0_i32_0 = arith.constant 0 : i32
    %c0_i32_1 = arith.constant 0 : i32
    return %c0_i32, %c0_i32_0 : i32, i32
  }
  func.func @transform_3(%arg0: i32) -> (i32, i32) {
    %c0_i32 = arith.constant 0 : i32
    %c0_i32_0 = arith.constant 0 : i32
    %c0_i32_1 = arith.constant 0 : i32
    return %c0_i32, %c0_i32_0 : i32, i32
  }
  func.func @transform_4(%arg0: i32) -> (i32, i32) {
    %c0_i32 = arith.constant 0 : i32
    %c0_i32_0 = arith.constant 0 : i32
    %c0_i32_1 = arith.constant 0 : i32
    return %c0_i32, %c0_i32_0 : i32, i32
  }
  func.func @transform_5(%arg0: i32) -> (i32, i32) {
    %c0_i32 = arith.constant 0 : i32
    %c0_i32_0 = arith.constant 0 : i32
    %c0_i32_1 = arith.constant 0 : i32
    return %c0_i32, %c0_i32_0 : i32, i32
  }
  func.func @transform_6(%arg0: i32) -> (i32, i32) {
    %c0_i32 = arith.constant 0 : i32
    %c0_i32_0 = arith.constant 0 : i32
    %c0_i32_1 = arith.constant 0 : i32
    return %c0_i32, %c0_i32_0 : i32, i32
  }
  func.func @transform_7(%arg0: i32) -> (i32, i32) {
    %c0_i32 = arith.constant 0 : i32
    %c0_i32_0 = arith.constant 0 : i32
    return %arg0, %c0_i32 : i32, i32
  }
  func.func @transform_8(%arg0: i32) -> (i32, i32) {
    %c0_i32 = arith.constant 0 : i32
    %c0_i32_0 = arith.constant 0 : i32
    return %arg0, %c0_i32 : i32, i32
  }
}

</mosaic_0001>

<llo_original>
// kernel: ensemble_forward.1
$region0: #{ensemble_forward.1}
  #allocation0 [shape = 'u32[]', space=smem, size = 0x4, offset = 0x4, fixed_abs, tag = 'smem constant byte address 0x4 - core index']
  #allocation1 [shape = 'u32[72,128]{1,0:T(1,128)}', space=vmem, size = 0x9000, scoped, tag = 'internal scratch']
  %s0 = inlined_call_operand.vmem [shape: f32[256,256], index: 0, kind: input, shape index: {}]
  %s1 = inlined_call_operand.vmem [shape: f32[256,256], index: 1, kind: input, shape index: {}]
  %s2 = inlined_call_operand.vmem [shape: f32[1,256], index: 2, kind: input, shape index: {}]
  %s3 = inlined_call_operand.vmem [shape: bf16[256,128], index: 3, kind: input, shape index: {}]
  %s4 = inlined_call_operand.vmem [shape: f32[1,128], index: 4, kind: input, shape index: {}]
  %s5 = inlined_call_operand.vmem [shape: f32[32,128], index: 5, kind: input, shape index: {}]
  %s6 = inlined_call_operand.vmem [shape: f32[1,128], index: 6, kind: input, shape index: {}]
  %s7 = inlined_call_operand.vmem [shape: f32[256,256], index: 7, kind: output, shape index: {0}]
  %s8 = inlined_call_operand.vmem [shape: f32[64,128], index: 8, kind: output, shape index: {1}]
  %9 = xla_tuple %s7, %s8
  %s10 = sld [smem:[#allocation0]]
  $region69: #{ensemble_forward.1} parent=0
    _
  %s12 = ssub.s32 1, %s10
  %s13 = scalar_select 0, %s12, %s10
  loop: start=0, step=1, limit=4
  $region2: #{ensemble_forward.1} parent=0 // loop_pre_header
    _
  $region3: #{ensemble_forward.1} parent=0 // loop_header
    %s15 = sphi 0, %s19
    %p16 = scmp.ge.s32.totalorder %s15, 4
    %s25 = sphi 0, %s27
    %s28 = sphi 0, %s25
    %s29 = sphi 0, %s28
    %s45 = sphi 0, %s29
    %s51 = sphi 0, %s53
    %s54 = sphi 0, %s51
    %s55 = sphi 0, %s54
    %s71 = sphi 0, %s55
    %s75 = sphi 0, %s75
    %s77 = sphi 0, %s75
    %s78 = sphi 0, %s77
    %s92 = sphi 0, %s78
    %s96 = sphi 0, %s96
    %s98 = sphi 0, %s96
    %s99 = sphi 0, %s98
    %s113 = sphi 0, %s99
    %s117 = sphi 0, %s117
    %s119 = sphi 0, %s117
    %s120 = sphi 0, %s119
    %s134 = sphi 0, %s120
    %s138 = sphi 0, %s138
    %s140 = sphi 0, %s138
    %s141 = sphi 0, %s140
    %s155 = sphi 0, %s141
    %s159 = sphi 0, %s159
    %s161 = sphi 0, %s159
    %s162 = sphi 0, %s161
    %s176 = sphi 0, %s162
    %s182 = sphi 0, %s184
    %s185 = sphi 0, %s182
    %s186 = sphi 0, %s185
    %s202 = sphi 0, %s186
    %s208 = sphi 0, %s210
    %s211 = sphi 0, %s208
    %s212 = sphi 0, %s211
    %s228 = sphi 0, %s212
  $region4: #{ensemble_forward.1} parent=0 // loop_header_branch
    %18 = sbr.rel (%p16) target = $region8
  $region5: #{ensemble_forward.1} parent=0 // loop_body
    %s20 = ssub.s32 %s15, 1
    %s21 = ssub.s32 %s15, 2
    %s22 = sadd.s32 %s15, 1
    %s23 = ssub.s32 %s15, %s22
    %p24 = scmp.eq.s32.totalorder %s23, 0
    %s26 = sadd.s32 %s25, 1
    %s27 = scalar_select %p24, %s25, %s26
    %p30 = pneg %p24
    %p31 = scmp.eq.s32.totalorder %s15, 1
    %p32 = por %p30, %p31
    %p33 = scmp.ne.s32.totalorder %s25, %s28
    %p34 = scmp.eq.s32.totalorder %s15, 0
    %p35 = por %p33, %p34
    %p36 = scmp.ne.s32.totalorder %s25, %s28
    %p37 = scmp.eq.s32.totalorder %s20, 1
    %p38 = por %p36, %p37
    %p39 = scmp.ne.s32.totalorder %s28, %s29
    %p40 = scmp.eq.s32.totalorder %s20, 0
    %p41 = por %p39, %p40
    %p42 = scmp.ne.s32.totalorder %s28, %s29
    %p43 = scmp.eq.s32.totalorder %s21, 1
    %p44 = por %p42, %p43
    %p46 = scmp.ne.s32.totalorder %s29, %s45
    %p47 = scmp.eq.s32.totalorder %s21, 0
    %p48 = por %p46, %p47
    %s49 = ssub.s32 %s15, %s22
    %p50 = scmp.eq.s32.totalorder %s49, 0
    %s52 = sadd.s32 %s51, 1
    %s53 = scalar_select %p50, %s51, %s52
    %p56 = pneg %p50
    %p57 = scmp.eq.s32.totalorder %s15, 1
    %p58 = por %p56, %p57
    %p59 = scmp.ne.s32.totalorder %s51, %s54
    %p60 = scmp.eq.s32.totalorder %s15, 0
    %p61 = por %p59, %p60
    %p62 = scmp.ne.s32.totalorder %s51, %s54
    %p63 = scmp.eq.s32.totalorder %s20, 1
    %p64 = por %p62, %p63
    %p65 = scmp.ne.s32.totalorder %s54, %s55
    %p66 = scmp.eq.s32.totalorder %s20, 0
    %p67 = por %p65, %p66
    %p68 = scmp.ne.s32.totalorder %s54, %s55
    %p69 = scmp.eq.s32.totalorder %s21, 1
    %p70 = por %p68, %p69
    %p72 = scmp.ne.s32.totalorder %s55, %s71
    %p73 = scmp.eq.s32.totalorder %s21, 0
    %p74 = por %p72, %p73
    %s76 = sadd.s32 %s75, 1
    %p79 = scmp.eq.s32.totalorder %s15, 1
    %p80 = scmp.ne.s32.totalorder %s75, %s77
    %p81 = scmp.eq.s32.totalorder %s15, 0
    %p82 = por %p80, %p81
    %p83 = scmp.ne.s32.totalorder %s75, %s77
    %p84 = scmp.eq.s32.totalorder %s20, 1
    %p85 = por %p83, %p84
    %p86 = scmp.ne.s32.totalorder %s77, %s78
    %p87 = scmp.eq.s32.totalorder %s20, 0
    %p88 = por %p86, %p87
    %p89 = scmp.ne.s32.totalorder %s77, %s78
    %p90 = scmp.eq.s32.totalorder %s21, 1
    %p91 = por %p89, %p90
    %p93 = scmp.ne.s32.totalorder %s78, %s92
    %p94 = scmp.eq.s32.totalorder %s21, 0
    %p95 = por %p93, %p94
    %s97 = sadd.s32 %s96, 1
    %p100 = scmp.eq.s32.totalorder %s15, 1
    %p101 = scmp.ne.s32.totalorder %s96, %s98
    %p102 = scmp.eq.s32.totalorder %s15, 0
    %p103 = por %p101, %p102
    %p104 = scmp.ne.s32.totalorder %s96, %s98
    %p105 = scmp.eq.s32.totalorder %s20, 1
    %p106 = por %p104, %p105
    %p107 = scmp.ne.s32.totalorder %s98, %s99
    %p108 = scmp.eq.s32.totalorder %s20, 0
    %p109 = por %p107, %p108
    %p110 = scmp.ne.s32.totalorder %s98, %s99
    %p111 = scmp.eq.s32.totalorder %s21, 1
    %p112 = por %p110, %p111
    %p114 = scmp.ne.s32.totalorder %s99, %s113
    %p115 = scmp.eq.s32.totalorder %s21, 0
    %p116 = por %p114, %p115
    %s118 = sadd.s32 %s117, 1
    %p121 = scmp.eq.s32.totalorder %s15, 1
    %p122 = scmp.ne.s32.totalorder %s117, %s119
    %p123 = scmp.eq.s32.totalorder %s15, 0
    %p124 = por %p122, %p123
    %p125 = scmp.ne.s32.totalorder %s117, %s119
    %p126 = scmp.eq.s32.totalorder %s20, 1
    %p127 = por %p125, %p126
    %p128 = scmp.ne.s32.totalorder %s119, %s120
    %p129 = scmp.eq.s32.totalorder %s20, 0
    %p130 = por %p128, %p129
    %p131 = scmp.ne.s32.totalorder %s119, %s120
    %p132 = scmp.eq.s32.totalorder %s21, 1
    %p133 = por %p131, %p132
    %p135 = scmp.ne.s32.totalorder %s120, %s134
    %p136 = scmp.eq.s32.totalorder %s21, 0
    %p137 = por %p135, %p136
    %s139 = sadd.s32 %s138, 1
    %p142 = scmp.eq.s32.totalorder %s15, 1
    %p143 = scmp.ne.s32.totalorder %s138, %s140
    %p144 = scmp.eq.s32.totalorder %s15, 0
    %p145 = por %p143, %p144
    %p146 = scmp.ne.s32.totalorder %s138, %s140
    %p147 = scmp.eq.s32.totalorder %s20, 1
    %p148 = por %p146, %p147
    %p149 = scmp.ne.s32.totalorder %s140, %s141
    %p150 = scmp.eq.s32.totalorder %s20, 0
    %p151 = por %p149, %p150
    %p152 = scmp.ne.s32.totalorder %s140, %s141
    %p153 = scmp.eq.s32.totalorder %s21, 1
    %p154 = por %p152, %p153
    %p156 = scmp.ne.s32.totalorder %s141, %s155
    %p157 = scmp.eq.s32.totalorder %s21, 0
    %p158 = por %p156, %p157
    %s160 = sadd.s32 %s159, 1
    %p163 = scmp.eq.s32.totalorder %s15, 1
    %p164 = scmp.ne.s32.totalorder %s159, %s161
    %p165 = scmp.eq.s32.totalorder %s15, 0
    %p166 = por %p164, %p165
    %p167 = scmp.ne.s32.totalorder %s159, %s161
    %p168 = scmp.eq.s32.totalorder %s20, 1
    %p169 = por %p167, %p168
    %p170 = scmp.ne.s32.totalorder %s161, %s162
    %p171 = scmp.eq.s32.totalorder %s20, 0
    %p172 = por %p170, %p171
    %p173 = scmp.ne.s32.totalorder %s161, %s162
    %p174 = scmp.eq.s32.totalorder %s21, 1
    %p175 = por %p173, %p174
    %p177 = scmp.ne.s32.totalorder %s162, %s176
    %p178 = scmp.eq.s32.totalorder %s21, 0
    %p179 = por %p177, %p178
    %s180 = ssub.s32 %s15, %s22
    %p181 = scmp.eq.s32.totalorder %s180, 0
    %s183 = sadd.s32 %s182, 1
    %s184 = scalar_select %p181, %s182, %s183
    %p187 = pneg %p181
    %p188 = scmp.eq.s32.totalorder %s15, 1
    %p189 = por %p187, %p188
    %p190 = scmp.ne.s32.totalorder %s182, %s185
    %p191 = scmp.eq.s32.totalorder %s15, 0
    %p192 = por %p190, %p191
    %p193 = scmp.ne.s32.totalorder %s182, %s185
    %p194 = scmp.eq.s32.totalorder %s20, 1
    %p195 = por %p193, %p194
    %p196 = scmp.ne.s32.totalorder %s185, %s186
    %p197 = scmp.eq.s32.totalorder %s20, 0
    %p198 = por %p196, %p197
    %p199 = scmp.ne.s32.totalorder %s185, %s186
    %p200 = scmp.eq.s32.totalorder %s21, 1
    %p201 = por %p199, %p200
    %p203 = scmp.ne.s32.totalorder %s186, %s202
    %p204 = scmp.eq.s32.totalorder %s21, 0
    %p205 = por %p203, %p204
    %s206 = ssub.s32 %s15, %s22
    %p207 = scmp.eq.s32.totalorder %s206, 0
    %s209 = sadd.s32 %s208, 1
    %s210 = scalar_select %p207, %s208, %s209
    %p213 = pneg %p207
    %p214 = scmp.eq.s32.totalorder %s15, 1
    %p215 = por %p213, %p214
    %p216 = scmp.ne.s32.totalorder %s208, %s211
    %p217 = scmp.eq.s32.totalorder %s15, 0
    %p218 = por %p216, %p217
    %p219 = scmp.ne.s32.totalorder %s208, %s211
    %p220 = scmp.eq.s32.totalorder %s20, 1
    %p221 = por %p219, %p220
    %p222 = scmp.ne.s32.totalorder %s211, %s212
    %p223 = scmp.eq.s32.totalorder %s20, 0
    %p224 = por %p222, %p223
    %p225 = scmp.ne.s32.totalorder %s211, %s212
    %p226 = scmp.eq.s32.totalorder %s21, 1
    %p227 = por %p225, %p226
    %p229 = scmp.ne.s32.totalorder %s212, %s228
    %p230 = scmp.eq.s32.totalorder %s21, 0
    %p231 = por %p229, %p230
    %p232 = scmp.le.s32.totalorder 1, %s15
    %p233 = scmp.lt.s32.totalorder %s15, 3
    %p234 = pnand %p232, %p233
    %p235 = pneg %p234
    // Predicated region
    $region9: #{ensemble_forward.1} parent=5 // pred_check
      _
    $region10: #{ensemble_forward.1} parent=5 // pred_check_branch
      %237 = sbr.rel (%p234) target = $region12
    $region11: #{ensemble_forward.1} parent=5 // pred_region
      %s238 = ssub.s32 %s15, 1
      // Predicated region
      $region13: #{ensemble_forward.1} parent=11 // pred_check
        %p239 = pneg %p88
      $region14: #{ensemble_forward.1} parent=11 // pred_check_branch
        %241 = sbr.rel (%p239) target = $region16
      $region15: #{ensemble_forward.1} parent=11 // pred_region
        _
      $region16: #{ensemble_forward.1} parent=11 // pred_fallthru
        _
      // Predicated region
      $region17: #{ensemble_forward.1} parent=11 // pred_check
        %p242 = pneg %p109
      $region18: #{ensemble_forward.1} parent=11 // pred_check_branch
        %244 = sbr.rel (%p242) target = $region20
      $region19: #{ensemble_forward.1} parent=11 // pred_region
        _
      $region20: #{ensemble_forward.1} parent=11 // pred_fallthru
        _
      // Predicated region
      $region21: #{ensemble_forward.1} parent=11 // pred_check
        %p245 = pneg %p130
      $region22: #{ensemble_forward.1} parent=11 // pred_check_branch
        %247 = sbr.rel (%p245) target = $region24
      $region23: #{ensemble_forward.1} parent=11 // pred_region
        _
      $region24: #{ensemble_forward.1} parent=11 // pred_fallthru
        _
      // Predicated region
      $region25: #{ensemble_forward.1} parent=11 // pred_check
        %p248 = pneg %p151
      $region26: #{ensemble_forward.1} parent=11 // pred_check_branch
        %250 = sbr.rel (%p248) target = $region28
      $region27: #{ensemble_forward.1} parent=11 // pred_region
        _
      $region28: #{ensemble_forward.1} parent=11 // pred_fallthru
        _
      // Predicated region
      $region29: #{ensemble_forward.1} parent=11 // pred_check
        %p251 = pneg %p172
      $region30: #{ensemble_forward.1} parent=11 // pred_check_branch
        %253 = sbr.rel (%p251) target = $region32
      $region31: #{ensemble_forward.1} parent=11 // pred_region
        _
      $region32: #{ensemble_forward.1} parent=11 // pred_fallthru
        _
    $region12: #{ensemble_forward.1} parent=5 // pred_fallthru
      _
    %p254 = scmp.lt.s32.totalorder %s15, 2
    // Predicated region
    $region33: #{ensemble_forward.1} parent=5 // pred_check
      %p255 = pneg %p254
    $region34: #{ensemble_forward.1} parent=5 // pred_check_branch
      %257 = sbr.rel (%p255) target = $region36
    $region35: #{ensemble_forward.1} parent=5 // pred_region
      // Predicated region
      $region37: #{ensemble_forward.1} parent=35 // pred_check
        %p258 = pneg %p35
      $region38: #{ensemble_forward.1} parent=35 // pred_check_branch
        %260 = sbr.rel (%p258) target = $region40
      $region39: #{ensemble_forward.1} parent=35 // pred_region
        %s261 = smul.u32 16, %s15
        %p262 = scmp.lt.s32.totalorder %s261, 31
        %s263 = scalar_select %p262, %s261, 31
        %s264 = smul.addr %s263, 2
        %s265 = smul.addr %s264, 8
        %s266 = scalar_lea.vmem %s0, %s265
        %s267 = smul.u32 16, %s15
      $region40: #{ensemble_forward.1} parent=35 // pred_fallthru
        _
      // Predicated region
      $region41: #{ensemble_forward.1} parent=35 // pred_check
        %p268 = pneg %p61
      $region42: #{ensemble_forward.1} parent=35 // pred_check_branch
        %270 = sbr.rel (%p268) target = $region44
      $region43: #{ensemble_forward.1} parent=35 // pred_region
        %s271 = smul.u32 16, %s15
        %p272 = scmp.lt.s32.totalorder %s271, 31
        %s273 = scalar_select %p272, %s271, 31
        %s274 = smul.addr %s273, 2
        %s275 = smul.addr %s274, 8
        %s276 = scalar_lea.vmem %s1, %s275
        %s277 = smul.u32 16, %s15
      $region44: #{ensemble_forward.1} parent=35 // pred_fallthru
        _
    $region36: #{ensemble_forward.1} parent=5 // pred_fallthru
      _
    %p278 = scmp.le.s32.totalorder 1, %s15
    %p279 = scmp.lt.s32.totalorder %s15, 3
    %p280 = pnand %p278, %p279
    %p281 = pneg %p280
    // Predicated region
    $region45: #{ensemble_forward.1} parent=5 // pred_check
      _
    $region46: #{ensemble_forward.1} parent=5 // pred_check_branch
      %283 = sbr.rel (%p280) target = $region48
    $region47: #{ensemble_forward.1} parent=5 // pred_region
      %s284 = ssub.s32 %s15, 1
      %s285 = smul.u32 16, %s20
      %p286 = scmp.lt.s32.totalorder %s285, 31
      %s287 = scalar_select %p286, %s285, 31
      %s288 = smul.addr %s287, 2
      %s289 = smul.addr %s288, 8
      %s290 = scalar_lea.vmem %s0, %s289
      %p291 = pneg %p41
      %p292 = pneg %p38
      %s293 = smul.u32 16, %s20
      %p294 = scmp.lt.s32.totalorder %s293, 31
      %s295 = scalar_select %p294, %s293, 31
      %s296 = smul.addr %s295, 2
      %s297 = smul.addr %s296, 8
      %s298 = scalar_lea.vmem %s1, %s297
      %p299 = pneg %p67
      %p300 = pneg %p64
      %p301 = pneg %p88
      %p302 = pneg %p85
      %p303 = pneg %p109
      %p304 = pneg %p106
      %p305 = pneg %p130
      %p306 = pneg %p127
      %p307 = pneg %p151
      %p308 = pneg %p148
      %p309 = pneg %p172
      %p310 = pneg %p169
      %p311 = pneg %p198
      %p312 = pneg %p195
      %s313 = smul.u32 16, %s20
      %p314 = scmp.lt.s32.totalorder %s313, 31
      %s315 = scalar_select %p314, %s313, 31
      %s316 = smul.addr %s315, 2
      %s317 = smul.addr %s316, 8
      %s318 = scalar_lea.vmem %s7, %s317
      %p319 = pneg %p224
      %p320 = pneg %p221
      %s321 = smul.u32 4, %s20
      %p322 = scmp.lt.s32.totalorder %s321, 7
      %s323 = scalar_select %p322, %s321, 7
      %s324 = smul.addr %s323, 8
      %s325 = scalar_lea.vmem %s8, %s324
      %s326 = smul.u32 16, %s20
      %p327 = scmp.lt.s32.totalorder %s326, 31
      %s328 = scalar_select %p327, %s326, 31
      %s329 = smul.addr %s328, 2
      %s330 = smul.addr %s329, 8
      %s331 = scalar_lea.vmem %s0, %s330
      %s332 = smul.u32 16, %s20
      %s333 = smul.u32 16, %s20
      %p334 = scmp.lt.s32.totalorder %s333, 31
      %s335 = scalar_select %p334, %s333, 31
      %s336 = smul.addr %s335, 2
      %s337 = smul.addr %s336, 8
      %s338 = scalar_lea.vmem %s1, %s337
      %s339 = smul.u32 16, %s20
      %s340 = smul.u32 16, %s20
      %p341 = scmp.lt.s32.totalorder %s340, 31
      %s342 = scalar_select %p341, %s340, 31
      %s343 = smul.addr %s342, 2
      %s344 = smul.addr %s343, 8
      %s345 = scalar_lea.vmem %s7, %s344
      %s346 = smul.u32 16, %s20
      %s347 = smul.u32 4, %s20
      %p348 = scmp.lt.s32.totalorder %s347, 7
      %s349 = scalar_select %p348, %s347, 7
      %s350 = smul.addr %s349, 8
      %s351 = scalar_lea.vmem %s8, %s350
      %s352 = smul.u32 4, %s20
      %v353 = vld [vmem:[%s331] sm:$0xff]
      %v354 = vld [vmem:[%s331 + $0x8] sm:$0xff]
      %v355 = vld [vmem:[%s331 + $0x10] sm:$0xff]
      %v356 = vld [vmem:[%s331 + $0x18] sm:$0xff]
      %v357 = vld [vmem:[%s331 + $0x20] sm:$0xff]
      %v358 = vld [vmem:[%s331 + $0x28] sm:$0xff]
      %v359 = vld [vmem:[%s331 + $0x30] sm:$0xff]
      %v360 = vld [vmem:[%s331 + $0x38] sm:$0xff]
      %v361 = vld [vmem:[%s331 + $0x40] sm:$0xff]
      %v362 = vld [vmem:[%s331 + $0x48] sm:$0xff]
      %v363 = vld [vmem:[%s331 + $0x50] sm:$0xff]
      %v364 = vld [vmem:[%s331 + $0x58] sm:$0xff]
      %v365 = vld [vmem:[%s331 + $0x60] sm:$0xff]
      %v366 = vld [vmem:[%s331 + $0x68] sm:$0xff]
      %v367 = vld [vmem:[%s331 + $0x70] sm:$0xff]
      %v368 = vld [vmem:[%s331 + $0x78] sm:$0xff]
      %v369 = vld [vmem:[%s331 + $0x80] sm:$0xff]
      %v370 = vld [vmem:[%s331 + $0x88] sm:$0xff]
      %v371 = vld [vmem:[%s331 + $0x90] sm:$0xff]
      %v372 = vld [vmem:[%s331 + $0x98] sm:$0xff]
      %v373 = vld [vmem:[%s331 + $0xa0] sm:$0xff]
      %v374 = vld [vmem:[%s331 + $0xa8] sm:$0xff]
      %v375 = vld [vmem:[%s331 + $0xb0] sm:$0xff]
      %v376 = vld [vmem:[%s331 + $0xb8] sm:$0xff]
      %v377 = vld [vmem:[%s331 + $0xc0] sm:$0xff]
      %v378 = vld [vmem:[%s331 + $0xc8] sm:$0xff]
      %v379 = vld [vmem:[%s331 + $0xd0] sm:$0xff]
      %v380 = vld [vmem:[%s331 + $0xd8] sm:$0xff]
      %v381 = vld [vmem:[%s331 + $0xe0] sm:$0xff]
      %v382 = vld [vmem:[%s331 + $0xe8] sm:$0xff]
      %v383 = vld [vmem:[%s331 + $0xf0] sm:$0xff]
      %v384 = vld [vmem:[%s331 + $0xf8] sm:$0xff]
      %v385 = vld [vmem:[%s338] sm:$0xff]
      %v386 = vld [vmem:[%s338 + $0x8] sm:$0xff]
      %v387 = vld [vmem:[%s338 + $0x10] sm:$0xff]
      %v388 = vld [vmem:[%s338 + $0x18] sm:$0xff]
      %v389 = vld [vmem:[%s338 + $0x20] sm:$0xff]
      %v390 = vld [vmem:[%s338 + $0x28] sm:$0xff]
      %v391 = vld [vmem:[%s338 + $0x30] sm:$0xff]
      %v392 = vld [vmem:[%s338 + $0x38] sm:$0xff]
      %v393 = vld [vmem:[%s338 + $0x40] sm:$0xff]
      %v394 = vld [vmem:[%s338 + $0x48] sm:$0xff]
      %v395 = vld [vmem:[%s338 + $0x50] sm:$0xff]
      %v396 = vld [vmem:[%s338 + $0x58] sm:$0xff]
      %v397 = vld [vmem:[%s338 + $0x60] sm:$0xff]
      %v398 = vld [vmem:[%s338 + $0x68] sm:$0xff]
      %v399 = vld [vmem:[%s338 + $0x70] sm:$0xff]
      %v400 = vld [vmem:[%s338 + $0x78] sm:$0xff]
      %v401 = vld [vmem:[%s338 + $0x80] sm:$0xff]
      %v402 = vld [vmem:[%s338 + $0x88] sm:$0xff]
      %v403 = vld [vmem:[%s338 + $0x90] sm:$0xff]
      %v404 = vld [vmem:[%s338 + $0x98] sm:$0xff]
      %v405 = vld [vmem:[%s338 + $0xa0] sm:$0xff]
      %v406 = vld [vmem:[%s338 + $0xa8] sm:$0xff]
      %v407 = vld [vmem:[%s338 + $0xb0] sm:$0xff]
      %v408 = vld [vmem:[%s338 + $0xb8] sm:$0xff]
      %v409 = vld [vmem:[%s338 + $0xc0] sm:$0xff]
      %v410 = vld [vmem:[%s338 + $0xc8] sm:$0xff]
      %v411 = vld [vmem:[%s338 + $0xd0] sm:$0xff]
      %v412 = vld [vmem:[%s338 + $0xd8] sm:$0xff]
      %v413 = vld [vmem:[%s338 + $0xe0] sm:$0xff]
      %v414 = vld [vmem:[%s338 + $0xe8] sm:$0xff]
      %v415 = vld [vmem:[%s338 + $0xf0] sm:$0xff]
      %v416 = vld [vmem:[%s338 + $0xf8] sm:$0xff]
      %v417 = vld [vmem:[%s2] sm:$0x3]
      %v419 = vperm.slane %v417, 0
      %v420 = vperm.slane %v417, 1
      %v423 = vmul.f32 %v385, %v419
      %v424 = vmul.f32 %v386, %v420
      %v425 = vmul.f32 %v387, %v419
      %v426 = vmul.f32 %v388, %v420
      %v427 = vmul.f32 %v389, %v419
      %v428 = vmul.f32 %v390, %v420
      %v429 = vmul.f32 %v391, %v419
      %v430 = vmul.f32 %v392, %v420
      %v431 = vmul.f32 %v393, %v419
      %v432 = vmul.f32 %v394, %v420
      %v433 = vmul.f32 %v395, %v419
      %v434 = vmul.f32 %v396, %v420
      %v435 = vmul.f32 %v397, %v419
      %v436 = vmul.f32 %v398, %v420
      %v437 = vmul.f32 %v399, %v419
      %v438 = vmul.f32 %v400, %v420
      %v439 = vmul.f32 %v401, %v419
      %v440 = vmul.f32 %v402, %v420
      %v441 = vmul.f32 %v403, %v419
      %v442 = vmul.f32 %v404, %v420
      %v443 = vmul.f32 %v405, %v419
      %v444 = vmul.f32 %v406, %v420
      %v445 = vmul.f32 %v407, %v419
      %v446 = vmul.f32 %v408, %v420
      %v447 = vmul.f32 %v409, %v419
      %v448 = vmul.f32 %v410, %v420
      %v449 = vmul.f32 %v411, %v419
      %v450 = vmul.f32 %v412, %v420
      %v451 = vmul.f32 %v413, %v419
      %v452 = vmul.f32 %v414, %v420
      %v453 = vmul.f32 %v415, %v419
      %v454 = vmul.f32 %v416, %v420
      %v455 = vadd.f32 %v353, %v423
      %v456 = vadd.f32 %v354, %v424
      %v457 = vadd.f32 %v355, %v425
      %v458 = vadd.f32 %v356, %v426
      %v459 = vadd.f32 %v357, %v427
      %v460 = vadd.f32 %v358, %v428
      %v461 = vadd.f32 %v359, %v429
      %v462 = vadd.f32 %v360, %v430
      %v463 = vadd.f32 %v361, %v431
      %v464 = vadd.f32 %v362, %v432
      %v465 = vadd.f32 %v363, %v433
      %v466 = vadd.f32 %v364, %v434
      %v467 = vadd.f32 %v365, %v435
      %v468 = vadd.f32 %v366, %v436
      %v469 = vadd.f32 %v367, %v437
      %v470 = vadd.f32 %v368, %v438
      %v471 = vadd.f32 %v369, %v439
      %v472 = vadd.f32 %v370, %v440
      %v473 = vadd.f32 %v371, %v441
      %v474 = vadd.f32 %v372, %v442
      %v475 = vadd.f32 %v373, %v443
      %v476 = vadd.f32 %v374, %v444
      %v477 = vadd.f32 %v375, %v445
      %v478 = vadd.f32 %v376, %v446
      %v479 = vadd.f32 %v377, %v447
      %v480 = vadd.f32 %v378, %v448
      %v481 = vadd.f32 %v379, %v449
      %v482 = vadd.f32 %v380, %v450
      %v483 = vadd.f32 %v381, %v451
      %v484 = vadd.f32 %v382, %v452
      %v485 = vadd.f32 %v383, %v453
      %v486 = vadd.f32 %v384, %v454
      %487 = vst [vmem:[%s345] sm:$0xff] %v455
      %488 = vst [vmem:[%s345 + $0x8] sm:$0xff] %v456
      %489 = vst [vmem:[%s345 + $0x10] sm:$0xff] %v457
      %490 = vst [vmem:[%s345 + $0x18] sm:$0xff] %v458
      %491 = vst [vmem:[%s345 + $0x20] sm:$0xff] %v459
      %492 = vst [vmem:[%s345 + $0x28] sm:$0xff] %v460
      %493 = vst [vmem:[%s345 + $0x30] sm:$0xff] %v461
      %494 = vst [vmem:[%s345 + $0x38] sm:$0xff] %v462
      %495 = vst [vmem:[%s345 + $0x40] sm:$0xff] %v463
      %496 = vst [vmem:[%s345 + $0x48] sm:$0xff] %v464
      %497 = vst [vmem:[%s345 + $0x50] sm:$0xff] %v465
      %498 = vst [vmem:[%s345 + $0x58] sm:$0xff] %v466
      %499 = vst [vmem:[%s345 + $0x60] sm:$0xff] %v467
      %500 = vst [vmem:[%s345 + $0x68] sm:$0xff] %v468
      %501 = vst [vmem:[%s345 + $0x70] sm:$0xff] %v469
      %502 = vst [vmem:[%s345 + $0x78] sm:$0xff] %v470
      %503 = vst [vmem:[%s345 + $0x80] sm:$0xff] %v471
      %504 = vst [vmem:[%s345 + $0x88] sm:$0xff] %v472
      %505 = vst [vmem:[%s345 + $0x90] sm:$0xff] %v473
      %506 = vst [vmem:[%s345 + $0x98] sm:$0xff] %v474
      %507 = vst [vmem:[%s345 + $0xa0] sm:$0xff] %v475
      %508 = vst [vmem:[%s345 + $0xa8] sm:$0xff] %v476
      %509 = vst [vmem:[%s345 + $0xb0] sm:$0xff] %v477
      %510 = vst [vmem:[%s345 + $0xb8] sm:$0xff] %v478
      %511 = vst [vmem:[%s345 + $0xc0] sm:$0xff] %v479
      %512 = vst [vmem:[%s345 + $0xc8] sm:$0xff] %v480
      %513 = vst [vmem:[%s345 + $0xd0] sm:$0xff] %v481
      %514 = vst [vmem:[%s345 + $0xd8] sm:$0xff] %v482
      %515 = vst [vmem:[%s345 + $0xe0] sm:$0xff] %v483
      %516 = vst [vmem:[%s345 + $0xe8] sm:$0xff] %v484
      %517 = vst [vmem:[%s345 + $0xf0] sm:$0xff] %v485
      %518 = vst [vmem:[%s345 + $0xf8] sm:$0xff] %v486
      %v519 = vpack.c.bf16 %v457, %v455
      %v520 = vpack.c.bf16 %v458, %v456
      %v521 = vpack.c.bf16 %v461, %v459
      %v522 = vpack.c.bf16 %v462, %v460
      %v523 = vpack.c.bf16 %v465, %v463
      %v524 = vpack.c.bf16 %v466, %v464
      %v525 = vpack.c.bf16 %v469, %v467
      %v526 = vpack.c.bf16 %v470, %v468
      %v527 = vpack.c.bf16 %v473, %v471
      %v528 = vpack.c.bf16 %v474, %v472
      %v529 = vpack.c.bf16 %v477, %v475
      %v530 = vpack.c.bf16 %v478, %v476
      %v531 = vpack.c.bf16 %v481, %v479
      %v532 = vpack.c.bf16 %v482, %v480
      %v533 = vpack.c.bf16 %v485, %v483
      %v534 = vpack.c.bf16 %v486, %v484
      %v535 = vld [vmem:[%s3] sm:$0xf]
      %v536 = vld [vmem:[%s3 + $0x4] sm:$0xf]
      %v537 = vld [vmem:[%s3 + $0x8] sm:$0xf]
      %v538 = vld [vmem:[%s3 + $0xc] sm:$0xf]
      %v539 = vld [vmem:[%s3 + $0x10] sm:$0xf]
      %v540 = vld [vmem:[%s3 + $0x14] sm:$0xf]
      %v541 = vld [vmem:[%s3 + $0x18] sm:$0xf]
      %v542 = vld [vmem:[%s3 + $0x1c] sm:$0xf]
      %v543 = vld [vmem:[%s3 + $0x20] sm:$0xf]
      %v544 = vld [vmem:[%s3 + $0x24] sm:$0xf]
      %v545 = vld [vmem:[%s3 + $0x28] sm:$0xf]
      %v546 = vld [vmem:[%s3 + $0x2c] sm:$0xf]
      %v547 = vld [vmem:[%s3 + $0x30] sm:$0xf]
      %v548 = vld [vmem:[%s3 + $0x34] sm:$0xf]
      %v549 = vld [vmem:[%s3 + $0x38] sm:$0xf]
      %v550 = vld [vmem:[%s3 + $0x3c] sm:$0xf]
      %v551 = vld [vmem:[%s3 + $0x40] sm:$0xf]
      %v552 = vld [vmem:[%s3 + $0x44] sm:$0xf]
      %v553 = vld [vmem:[%s3 + $0x48] sm:$0xf]
      %v554 = vld [vmem:[%s3 + $0x4c] sm:$0xf]
      %v555 = vld [vmem:[%s3 + $0x50] sm:$0xf]
      %v556 = vld [vmem:[%s3 + $0x54] sm:$0xf]
      %v557 = vld [vmem:[%s3 + $0x58] sm:$0xf]
      %v558 = vld [vmem:[%s3 + $0x5c] sm:$0xf]
      %v559 = vld [vmem:[%s3 + $0x60] sm:$0xf]
      %v560 = vld [vmem:[%s3 + $0x64] sm:$0xf]
      %v561 = vld [vmem:[%s3 + $0x68] sm:$0xf]
      %v562 = vld [vmem:[%s3 + $0x6c] sm:$0xf]
      %v563 = vld [vmem:[%s3 + $0x70] sm:$0xf]
      %v564 = vld [vmem:[%s3 + $0x74] sm:$0xf]
      %v565 = vld [vmem:[%s3 + $0x78] sm:$0xf]
      %v566 = vld [vmem:[%s3 + $0x7c] sm:$0xf]
      %v567 = vld [vmem:[%s4] sm:$0x1]
      %v569 = vperm.slane %v567, 0
      %v603 = vunpack.c.l.b16 %v535
      %v604 = vunpack.c.l.b16 %v536
      %v605 = vunpack.c.l.b16 %v537
      %v606 = vunpack.c.l.b16 %v538
      %v607 = vunpack.c.l.b16 %v539
      %v608 = vunpack.c.l.b16 %v540
      %v609 = vunpack.c.l.b16 %v541
      %v610 = vunpack.c.l.b16 %v542
      %v611 = vunpack.c.l.b16 %v543
      %v612 = vunpack.c.l.b16 %v544
      %v613 = vunpack.c.l.b16 %v545
      %v614 = vunpack.c.l.b16 %v546
      %v615 = vunpack.c.l.b16 %v547
      %v616 = vunpack.c.l.b16 %v548
      %v617 = vunpack.c.l.b16 %v549
      %v618 = vunpack.c.l.b16 %v550
      %v619 = vunpack.c.l.b16 %v551
      %v620 = vunpack.c.l.b16 %v552
      %v621 = vunpack.c.l.b16 %v553
      %v622 = vunpack.c.l.b16 %v554
      %v623 = vunpack.c.l.b16 %v555
      %v624 = vunpack.c.l.b16 %v556
      %v625 = vunpack.c.l.b16 %v557
      %v626 = vunpack.c.l.b16 %v558
      %v627 = vunpack.c.l.b16 %v559
      %v628 = vunpack.c.l.b16 %v560
      %v629 = vunpack.c.l.b16 %v561
      %v630 = vunpack.c.l.b16 %v562
      %v631 = vunpack.c.l.b16 %v563
      %v632 = vunpack.c.l.b16 %v564
      %v633 = vunpack.c.l.b16 %v565
      %v634 = vunpack.c.l.b16 %v566
      %v635 = vpack.c.b16 %v604, %v603
      %v636 = vpack.c.b16 %v606, %v605
      %v637 = vpack.c.b16 %v608, %v607
      %v638 = vpack.c.b16 %v610, %v609
      %v639 = vpack.c.b16 %v612, %v611
      %v640 = vpack.c.b16 %v614, %v613
      %v641 = vpack.c.b16 %v616, %v615
      %v642 = vpack.c.b16 %v618, %v617
      %v643 = vpack.c.b16 %v620, %v619
      %v644 = vpack.c.b16 %v622, %v621
      %v645 = vpack.c.b16 %v624, %v623
      %v646 = vpack.c.b16 %v626, %v625
      %v647 = vpack.c.b16 %v628, %v627
      %v648 = vpack.c.b16 %v630, %v629
      %v649 = vpack.c.b16 %v632, %v631
      %v650 = vpack.c.b16 %v634, %v633
      %667 = vmatpush.bf16.msra.mxu0 %v642
      %668 = vmatpush.bf16.msra.mxu0 %v641
      %669 = vmatpush.bf16.msra.mxu0 %v640
      %670 = vmatpush.bf16.msra.mxu0 %v639
      %671 = vmatpush.bf16.msra.mxu0 %v638
      %672 = vmatpush.bf16.msra.mxu0 %v637
      %673 = vmatpush.bf16.msra.mxu0 %v636
      %674 = vmatpush.bf16.msra.mxu0 %v635
      %675 = vmatmul.bf16.gmra.mxu0 %v519
      %v676 = vpop.f32.mrf.mxu0
      %v677 = vadd.f32 %v569, %v676
      %v678 = vpop.f32.mrf.mxu0
      %v679 = vadd.f32 %v569, %v678
      %680 = vmatmul.bf16.gmra.mxu0 %v521
      %v681 = vpop.f32.mrf.mxu0
      %v682 = vadd.f32 %v569, %v681
      %v683 = vpop.f32.mrf.mxu0
      %v684 = vadd.f32 %v569, %v683
      %685 = vmatmul.bf16.gmra.mxu0 %v523
      %v686 = vpop.f32.mrf.mxu0
      %v687 = vadd.f32 %v569, %v686
      %v688 = vpop.f32.mrf.mxu0
      %v689 = vadd.f32 %v569, %v688
      %690 = vmatmul.bf16.gmra.mxu0 %v525
      %v691 = vpop.f32.mrf.mxu0
      %v692 = vadd.f32 %v569, %v691
      %v693 = vpop.f32.mrf.mxu0
      %v694 = vadd.f32 %v569, %v693
      %695 = vmatmul.bf16.gmra.mxu0 %v527
      %v696 = vpop.f32.mrf.mxu0
      %v697 = vadd.f32 %v569, %v696
      %v698 = vpop.f32.mrf.mxu0
      %v699 = vadd.f32 %v569, %v698
      %700 = vmatmul.bf16.gmra.mxu0 %v529
      %v701 = vpop.f32.mrf.mxu0
      %v702 = vadd.f32 %v569, %v701
      %v703 = vpop.f32.mrf.mxu0
      %v704 = vadd.f32 %v569, %v703
      %705 = vmatmul.bf16.gmra.mxu0 %v531
      %v706 = vpop.f32.mrf.mxu0
      %v707 = vadd.f32 %v569, %v706
      %v708 = vpop.f32.mrf.mxu0
      %v709 = vadd.f32 %v569, %v708
      %710 = vmatmul.bf16.gmra.mxu0 %v533
      %v711 = vpop.f32.mrf.mxu0
      %v712 = vadd.f32 %v569, %v711
      %v713 = vpop.f32.mrf.mxu0
      %v714 = vadd.f32 %v569, %v713
      %715 = vdwg.mxu0
      %716 = vmatpush.bf16.msra.mxu0 %v650
      %717 = vmatpush.bf16.msra.mxu0 %v649
      %718 = vmatpush.bf16.msra.mxu0 %v648
      %719 = vmatpush.bf16.msra.mxu0 %v647
      %720 = vmatpush.bf16.msra.mxu0 %v646
      %721 = vmatpush.bf16.msra.mxu0 %v645
      %722 = vmatpush.bf16.msra.mxu0 %v644
      %723 = vmatpush.bf16.msra.mxu0 %v643
      %724 = vmatmul.bf16.gmra.mxu0 %v520
      %v725 = vpop.f32.mrf.mxu0
      %v726 = vadd.f32 %v677, %v725
      %v727 = vpop.f32.mrf.mxu0
      %v728 = vadd.f32 %v679, %v727
      %729 = vmatmul.bf16.gmra.mxu0 %v522
      %v730 = vpop.f32.mrf.mxu0
      %v731 = vadd.f32 %v682, %v730
      %v732 = vpop.f32.mrf.mxu0
      %v733 = vadd.f32 %v684, %v732
      %734 = vmatmul.bf16.gmra.mxu0 %v524
      %v735 = vpop.f32.mrf.mxu0
      %v736 = vadd.f32 %v687, %v735
      %v737 = vpop.f32.mrf.mxu0
      %v738 = vadd.f32 %v689, %v737
      %739 = vmatmul.bf16.gmra.mxu0 %v526
      %v740 = vpop.f32.mrf.mxu0
      %v741 = vadd.f32 %v692, %v740
      %v742 = vpop.f32.mrf.mxu0
      %v743 = vadd.f32 %v694, %v742
      %744 = vmatmul.bf16.gmra.mxu0 %v528
      %v745 = vpop.f32.mrf.mxu0
      %v746 = vadd.f32 %v697, %v745
      %v747 = vpop.f32.mrf.mxu0
      %v748 = vadd.f32 %v699, %v747
      %749 = vmatmul.bf16.gmra.mxu0 %v530
      %v750 = vpop.f32.mrf.mxu0
      %v751 = vadd.f32 %v702, %v750
      %v752 = vpop.f32.mrf.mxu0
      %v753 = vadd.f32 %v704, %v752
      %754 = vmatmul.bf16.gmra.mxu0 %v532
      %v755 = vpop.f32.mrf.mxu0
      %v756 = vadd.f32 %v707, %v755
      %v757 = vpop.f32.mrf.mxu0
      %v758 = vadd.f32 %v709, %v757
      %759 = vmatmul.bf16.gmra.mxu0 %v534
      %v760 = vpop.f32.mrf.mxu0
      %v761 = vadd.f32 %v712, %v760
      %v762 = vpop.f32.mrf.mxu0
      %v763 = vadd.f32 %v714, %v762
      %764 = vdwg.mxu0
      %v765 = vld [vmem:[%s6] sm:$0x1]
      %v766 = vsub.f32 1.0, %v765
      %768 = vset.pattern.permute.xlu0 8
      %769 = vperm.xlu0 %768, %v726
      %v770 = vpop.permute.xlu0 %769
      %773 = vset.pattern.permute.xlu0 8
      %774 = vperm.xlu0 %773, %v728
      %v775 = vpop.permute.xlu0 %774
      %778 = vset.pattern.permute.xlu0 8
      %779 = vperm.xlu0 %778, %v731
      %v780 = vpop.permute.xlu0 %779
      %783 = vset.pattern.permute.xlu0 8
      %784 = vperm.xlu0 %783, %v733
      %v785 = vpop.permute.xlu0 %784
      %788 = vset.pattern.permute.xlu0 8
      %789 = vperm.xlu0 %788, %v736
      %v790 = vpop.permute.xlu0 %789
      %793 = vset.pattern.permute.xlu0 8
      %794 = vperm.xlu0 %793, %v738
      %v795 = vpop.permute.xlu0 %794
      %798 = vset.pattern.permute.xlu0 8
      %799 = vperm.xlu0 %798, %v741
      %v800 = vpop.permute.xlu0 %799
      %803 = vset.pattern.permute.xlu0 8
      %804 = vperm.xlu0 %803, %v743
      %v805 = vpop.permute.xlu0 %804
      %808 = vset.pattern.permute.xlu0 8
      %809 = vperm.xlu0 %808, %v746
      %v810 = vpop.permute.xlu0 %809
      %813 = vset.pattern.permute.xlu0 8
      %814 = vperm.xlu0 %813, %v748
      %v815 = vpop.permute.xlu0 %814
      %818 = vset.pattern.permute.xlu0 8
      %819 = vperm.xlu0 %818, %v751
      %v820 = vpop.permute.xlu0 %819
      %823 = vset.pattern.permute.xlu0 8
      %824 = vperm.xlu0 %823, %v753
      %v825 = vpop.permute.xlu0 %824
      %828 = vset.pattern.permute.xlu0 8
      %829 = vperm.xlu0 %828, %v756
      %v830 = vpop.permute.xlu0 %829
      %833 = vset.pattern.permute.xlu0 8
      %834 = vperm.xlu0 %833, %v758
      %v835 = vpop.permute.xlu0 %834
      %838 = vset.pattern.permute.xlu0 8
      %839 = vperm.xlu0 %838, %v761
      %v840 = vpop.permute.xlu0 %839
      %843 = vset.pattern.permute.xlu0 8
      %844 = vperm.xlu0 %843, %v763
      %v845 = vpop.permute.xlu0 %844
      %v848 = vperm.slane %v766, 0
      %v850 = vmul.f32 %v770, %v848
      %v851 = vmul.f32 %v775, %v848
      %v852 = vmul.f32 %v780, %v848
      %v853 = vmul.f32 %v785, %v848
      %v854 = vmul.f32 %v790, %v848
      %v855 = vmul.f32 %v795, %v848
      %v856 = vmul.f32 %v800, %v848
      %v857 = vmul.f32 %v805, %v848
      %v858 = vmul.f32 %v810, %v848
      %v859 = vmul.f32 %v815, %v848
      %v860 = vmul.f32 %v820, %v848
      %v861 = vmul.f32 %v825, %v848
      %v862 = vmul.f32 %v830, %v848
      %v863 = vmul.f32 %v835, %v848
      %v864 = vmul.f32 %v840, %v848
      %v865 = vmul.f32 %v845, %v848
      %v867 = vperm.slane %v765, 0
      %v869 = vadd.f32 %v850, %v867
      %v870 = vadd.f32 %v851, %v867
      %v871 = vadd.f32 %v852, %v867
      %v872 = vadd.f32 %v853, %v867
      %v873 = vadd.f32 %v854, %v867
      %v874 = vadd.f32 %v855, %v867
      %v875 = vadd.f32 %v856, %v867
      %v876 = vadd.f32 %v857, %v867
      %v877 = vadd.f32 %v858, %v867
      %v878 = vadd.f32 %v859, %v867
      %v879 = vadd.f32 %v860, %v867
      %v880 = vadd.f32 %v861, %v867
      %v881 = vadd.f32 %v862, %v867
      %v882 = vadd.f32 %v863, %v867
      %v883 = vadd.f32 %v864, %v867
      %v884 = vadd.f32 %v865, %v867
      %v885 = vmul.f32 %v726, %v869
      %v886 = vmul.f32 %v728, %v870
      %v887 = vmul.f32 %v731, %v871
      %v888 = vmul.f32 %v733, %v872
      %v889 = vmul.f32 %v736, %v873
      %v890 = vmul.f32 %v738, %v874
      %v891 = vmul.f32 %v741, %v875
      %v892 = vmul.f32 %v743, %v876
      %v893 = vmul.f32 %v746, %v877
      %v894 = vmul.f32 %v748, %v878
      %v895 = vmul.f32 %v751, %v879
      %v896 = vmul.f32 %v753, %v880
      %v897 = vmul.f32 %v756, %v881
      %v898 = vmul.f32 %v758, %v882
      %v899 = vmul.f32 %v761, %v883
      %v900 = vmul.f32 %v763, %v884
      %v901 = vld [vmem:[%s5] sm:$0xff]
      %v902 = vld [vmem:[%s5 + $0x8] sm:$0xff]
      %v903 = vld [vmem:[%s5 + $0x10] sm:$0xff]
      %v904 = vld [vmem:[%s5 + $0x18] sm:$0xff]
      %905 = vmatpush.msra.mxu0 %v900
      %906 = vmatpush.msra.mxu0 %v899
      %907 = vmatpush.msra.mxu0 %v898
      %908 = vmatpush.msra.mxu0 %v897
      %909 = vmatpush.msra.mxu0 %v896
      %910 = vmatpush.msra.mxu0 %v895
      %911 = vmatpush.msra.mxu0 %v894
      %912 = vmatpush.msra.mxu0 %v893
      %913 = vmatpush.msra.mxu0 %v892
      %914 = vmatpush.msra.mxu0 %v891
      %915 = vmatpush.msra.mxu0 %v890
      %916 = vmatpush.msra.mxu0 %v889
      %917 = vmatpush.msra.mxu0 %v888
      %918 = vmatpush.msra.mxu0 %v887
      %919 = vmatpush.msra.mxu0 %v886
      %920 = vmatpush.msra.mxu0 %v885
      %921 = vmatmul.f32.gmra.mxu0 %v901
      %v922 = vpop.f32.mrf.mxu0
      %v923 = vadd.f32 0.0, %v922
      %924 = vmatmul.f32.gmra.mxu0 %v902
      %v925 = vpop.f32.mrf.mxu0
      %v926 = vadd.f32 0.0, %v925
      %927 = vmatmul.f32.gmra.mxu0 %v903
      %v928 = vpop.f32.mrf.mxu0
      %v929 = vadd.f32 0.0, %v928
      %930 = vmatmul.f32.gmra.mxu0 %v904
      %v931 = vpop.f32.mrf.mxu0
      %v932 = vadd.f32 0.0, %v931
      %933 = vdwg.mxu0
      %935 = vset.pattern.permute.xlu0 8
      %936 = vperm.xlu0 %935, %v923
      %v937 = vpop.permute.xlu0 %936
      %940 = vset.pattern.permute.xlu0 8
      %941 = vperm.xlu0 %940, %v926
      %v942 = vpop.permute.xlu0 %941
      %945 = vset.pattern.permute.xlu0 8
      %946 = vperm.xlu0 %945, %v929
      %v947 = vpop.permute.xlu0 %946
      %950 = vset.pattern.permute.xlu0 8
      %951 = vperm.xlu0 %950, %v932
      %v952 = vpop.permute.xlu0 %951
      %v954 = vrcp.pop %v937
      %v955 = vmul.f32 %v937, %v954
      %v956 = vsub.f32 1.0, %v955
      %v957 = vmul.f32 %v954, %v956
      %v958 = vadd.f32 %v954, %v957
      %vm959 = vweird.f32 %v937
      %vm960 = vweird.f32 %v954
      %vm961 = vmor %vm959, %vm960
      %v962 = vsel %vm961, %v954, %v958
      %v963 = vand.u32 2147483647, %v937
      %vm964 = vcmp.eq.f32.partialorder %v963, 8.507059e+37
      %v965 = vand.u32 %v937, 2147483648
      %v966 = vor.u32 1.1754944e-38, %v965
      %v967 = vsel %vm964, %v966, %v962
      %v968 = vmul.f32 %v923, %v967
      %v969 = vrcp.pop %v942
      %v970 = vmul.f32 %v942, %v969
      %v971 = vsub.f32 1.0, %v970
      %v972 = vmul.f32 %v969, %v971
      %v973 = vadd.f32 %v969, %v972
      %vm974 = vweird.f32 %v942
      %vm975 = vweird.f32 %v969
      %vm976 = vmor %vm974, %vm975
      %v977 = vsel %vm976, %v969, %v973
      %v978 = vand.u32 2147483647, %v942
      %vm979 = vcmp.eq.f32.partialorder %v978, 8.507059e+37
      %v980 = vand.u32 %v942, 2147483648
      %v981 = vor.u32 1.1754944e-38, %v980
      %v982 = vsel %vm979, %v981, %v977
      %v983 = vmul.f32 %v926, %v982
      %v984 = vrcp.pop %v947
      %v985 = vmul.f32 %v947, %v984
      %v986 = vsub.f32 1.0, %v985
      %v987 = vmul.f32 %v984, %v986
      %v988 = vadd.f32 %v984, %v987
      %vm989 = vweird.f32 %v947
      %vm990 = vweird.f32 %v984
      %vm991 = vmor %vm989, %vm990
      %v992 = vsel %vm991, %v984, %v988
      %v993 = vand.u32 2147483647, %v947
      %vm994 = vcmp.eq.f32.partialorder %v993, 8.507059e+37
      %v995 = vand.u32 %v947, 2147483648
      %v996 = vor.u32 1.1754944e-38, %v995
      %v997 = vsel %vm994, %v996, %v992
      %v998 = vmul.f32 %v929, %v997
      %v999 = vrcp.pop %v952
      %v1000 = vmul.f32 %v952, %v999
      %v1001 = vsub.f32 1.0, %v1000
      %v1002 = vmul.f32 %v999, %v1001
      %v1003 = vadd.f32 %v999, %v1002
      %vm1004 = vweird.f32 %v952
      %vm1005 = vweird.f32 %v999
      %vm1006 = vmor %vm1004, %vm1005
      %v1007 = vsel %vm1006, %v999, %v1003
      %v1008 = vand.u32 2147483647, %v952
      %vm1009 = vcmp.eq.f32.partialorder %v1008, 8.507059e+37
      %v1010 = vand.u32 %v952, 2147483648
      %v1011 = vor.u32 1.1754944e-38, %v1010
      %v1012 = vsel %vm1009, %v1011, %v1007
      %v1013 = vmul.f32 %v932, %v1012
      %1014 = vst [vmem:[%s351] sm:$0xff] %v968
      %1015 = vst [vmem:[%s351 + $0x8] sm:$0xff] %v983
      %1016 = vst [vmem:[%s351 + $0x10] sm:$0xff] %v998
      %1017 = vst [vmem:[%s351 + $0x18] sm:$0xff] %v1013
      %s1018 = smul.u32 16, %s20
      %p1019 = scmp.lt.s32.totalorder %s1018, 31
      %s1020 = scalar_select %p1019, %s1018, 31
      %s1021 = smul.addr %s1020, 2
      %s1022 = smul.addr %s1021, 8
      %s1023 = scalar_lea.vmem %s7, %s1022
      %s1024 = smul.u32 4, %s20
      %p1025 = scmp.lt.s32.totalorder %s1024, 7
      %s1026 = scalar_select %p1025, %s1024, 7
      %s1027 = smul.addr %s1026, 8
      %s1028 = scalar_lea.vmem %s8, %s1027
      // Predicated region
      $region49: #{ensemble_forward.1} parent=47 // pred_check
        %p1029 = pneg %p195
      $region50: #{ensemble_forward.1} parent=47 // pred_check_branch
        %1031 = sbr.rel (%p1029) target = $region52
      $region51: #{ensemble_forward.1} parent=47 // pred_region
        %s1032 = smul.u32 16, %s20
      $region52: #{ensemble_forward.1} parent=47 // pred_fallthru
        _
      // Predicated region
      $region53: #{ensemble_forward.1} parent=47 // pred_check
        %p1033 = pneg %p221
      $region54: #{ensemble_forward.1} parent=47 // pred_check_branch
        %1035 = sbr.rel (%p1033) target = $region56
      $region55: #{ensemble_forward.1} parent=47 // pred_region
        %s1036 = smul.u32 4, %s20
      $region56: #{ensemble_forward.1} parent=47 // pred_fallthru
        _
    $region48: #{ensemble_forward.1} parent=5 // pred_fallthru
      _
    %p1037 = scmp.le.s32.totalorder 2, %s15
    // Predicated region
    $region57: #{ensemble_forward.1} parent=5 // pred_check
      %p1038 = pneg %p1037
    $region58: #{ensemble_forward.1} parent=5 // pred_check_branch
      %1040 = sbr.rel (%p1038) target = $region60
    $region59: #{ensemble_forward.1} parent=5 // pred_region
      %s1041 = ssub.s32 %s15, 2
      // Predicated region
      $region61: #{ensemble_forward.1} parent=59 // pred_check
        %p1042 = pneg %p201
      $region62: #{ensemble_forward.1} parent=59 // pred_check_branch
        %1044 = sbr.rel (%p1042) target = $region64
      $region63: #{ensemble_forward.1} parent=59 // pred_region
        %s1045 = smul.u32 16, %s21
        %p1046 = scmp.lt.s32.totalorder %s1045, 31
        %s1047 = scalar_select %p1046, %s1045, 31
        %s1048 = smul.addr %s1047, 2
        %s1049 = smul.addr %s1048, 8
        %s1050 = scalar_lea.vmem %s7, %s1049
      $region64: #{ensemble_forward.1} parent=59 // pred_fallthru
        _
      // Predicated region
      $region65: #{ensemble_forward.1} parent=59 // pred_check
        %p1051 = pneg %p227
      $region66: #{ensemble_forward.1} parent=59 // pred_check_branch
        %1053 = sbr.rel (%p1051) target = $region68
      $region67: #{ensemble_forward.1} parent=59 // pred_region
        %s1054 = smul.u32 4, %s21
        %p1055 = scmp.lt.s32.totalorder %s1054, 7
        %s1056 = scalar_select %p1055, %s1054, 7
        %s1057 = smul.addr %s1056, 8
        %s1058 = scalar_lea.vmem %s8, %s1057
      $region68: #{ensemble_forward.1} parent=59 // pred_fallthru
        _
    $region60: #{ensemble_forward.1} parent=5 // pred_fallthru
      _
  $region6: #{ensemble_forward.1} parent=0 // loop_footer
    %s19 = sadd.s32 1, %s15
  $region7: #{ensemble_forward.1} parent=0 // loop_footer_branch
    %14 = sbr.rel target = $region3
  $region8: #{ensemble_forward.1} parent=0 // loop_exit
    _

</llo_original>
